<compile_context>
chip_gen: v7x
topology: tpu7x:2x2x1
jax: 0.10.0
libtpu: 0.0.40
codegen_flags: <defaults>
</compile_context>

<pallas_src>
import jax
import jax.numpy as jnp
import numpy as np
from jax.experimental import pallas as pl
from jax.experimental.pallas import tpu as pltpu


# ------------------------- configuration (small) ---------------------------
class Opt:
    n_classes = 10
    label_dim = 16
    channels = 1
    img_size = 8          # img_shape = (1, 8, 8) -> prod = 64


HIDDEN = 256
OUT_PAD = 128            # lane-dense padding of the final (256 -> 1) layer
TILE_B_MAX = 256         # batch tile that feeds the 256x256 MXU on v6e/v7x


def _round_up(x, m):
    return ((x + m - 1) // m) * m


def _leaky_relu(x, slope=0.2):
    return jnp.where(x > 0, x, slope * x)


# ------------------------------ Pallas kernel ------------------------------
def mlp_kernel(xi_ref, xe_ref,
               w1i_ref, w1e_ref, b1_ref,
               w2_ref, b2_ref,
               w3_ref, b3_ref,
               w4_ref, b4_ref,
               out_ref):
    # Layer 1: W1 split into img/emb halves -> no materialized 80-wide concat;
    # both operand lane widths (64 / 16) equal their full array dims (aligned).
    h = (jnp.dot(xi_ref[...], w1i_ref[...], preferred_element_type=jnp.float32)
         + jnp.dot(xe_ref[...], w1e_ref[...], preferred_element_type=jnp.float32)
         + b1_ref[...])
    h = _leaky_relu(h)                                   # f32 elementwise

    h = jnp.dot(h.astype(jnp.bfloat16), w2_ref[...],
                preferred_element_type=jnp.float32) + b2_ref[...]
    # Dropout(0.4) -> identity in eval mode
    h = _leaky_relu(h)

    h = jnp.dot(h.astype(jnp.bfloat16), w3_ref[...],
                preferred_element_type=jnp.float32) + b3_ref[...]
    # Dropout(0.4) -> identity in eval mode
    h = _leaky_relu(h)

    # Layer 4 is zero-padded from 1 -> OUT_PAD columns so the store is an
    # unmasked lane-dense vst; column 0 holds the real logit.
    z = jnp.dot(h.astype(jnp.bfloat16), w4_ref[...],
                preferred_element_type=jnp.float32) + b4_ref[...]
    out_ref[...] = jax.nn.sigmoid(z).astype(out_ref.dtype)


# -------------------------------- wrapper ----------------------------------
@jax.jit
def discriminator1_forward(img, labels, params):
    """img: (B, C, H, W) float32, labels: (B,) int32 -> (B, 1) float32."""
    B = img.shape[0]
    d_img = params["w1_img"].shape[0]
    label_dim = params["w1_emb"].shape[0]

    # glue: embedding lookup + flatten (matches torch.cat((img, emb), -1) with
    # a row-major NCHW flatten); operands cast to bf16 for the MXU.
    emb = params["embedding"][labels].astype(jnp.bfloat16)          # (B, label_dim)
    img_flat = img.reshape(B, -1).astype(jnp.bfloat16)               # (B, d_img)

    tile_b = min(TILE_B_MAX, _round_up(B, 8))
    b_pad = _round_up(B, tile_b)
    if b_pad != B:
        pad = ((0, b_pad - B), (0, 0))
        img_flat = jnp.pad(img_flat, pad)
        emb = jnp.pad(emb, pad)

    def row_spec(shape):
        return pl.BlockSpec(shape, lambda i: (i, 0))

    def weight_spec(shape):
        return pl.BlockSpec(shape, lambda i: (0, 0))     # VMEM-resident

    out = pl.pallas_call(
        mlp_kernel,
        out_shape=jax.ShapeDtypeStruct((b_pad, OUT_PAD), jnp.float32),
        grid=(b_pad // tile_b,),
        in_specs=[
            row_spec((tile_b, d_img)),                   # img_flat block
            row_spec((tile_b, label_dim)),               # emb block
            weight_spec((d_img, HIDDEN)),                # w1_img
            weight_spec((label_dim, HIDDEN)),            # w1_emb
            weight_spec((1, HIDDEN)),                    # b1
            weight_spec((HIDDEN, HIDDEN)),               # w2
            weight_spec((1, HIDDEN)),                    # b2
            weight_spec((HIDDEN, HIDDEN)),               # w3
            weight_spec((1, HIDDEN)),                    # b3
            weight_spec((HIDDEN, OUT_PAD)),              # w4 (padded)
            weight_spec((1, OUT_PAD)),                   # b4 (padded)
        ],
        out_specs=row_spec((tile_b, OUT_PAD)),
        compiler_params=pltpu.CompilerParams(
            dimension_semantics=("parallel",)),
    )(
        img_flat, emb,
        params["w1_img"], params["w1_emb"], params["b1"],
        params["w2"], params["b2"],
        params["w3"], params["b3"],
        params["w4_pad"], params["b4_pad"],
    )
    return out[:B, :1]


# --------------------------- deterministic init -----------------------------
def init_params(opt, key):
    d_img = int(np.prod((opt.channels, opt.img_size, opt.img_size)))
    d_in = opt.label_dim + d_img
    ks = jax.random.split(key, 9)

    def linear(kw, kb, fan_in, fan_out):
        # PyTorch nn.Linear default: U(-1/sqrt(fan_in), 1/sqrt(fan_in))
        bound = 1.0 / np.sqrt(fan_in)
        w = jax.random.uniform(kw, (fan_in, fan_out), jnp.float32, -bound, bound)
        b = jax.random.uniform(kb, (1, fan_out), jnp.float32, -bound, bound)
        return w, b

    w1, b1 = linear(ks[0], ks[1], d_in, HIDDEN)
    w2, b2 = linear(ks[2], ks[3], HIDDEN, HIDDEN)
    w3, b3 = linear(ks[4], ks[5], HIDDEN, HIDDEN)
    w4, b4 = linear(ks[6], ks[7], HIDDEN, 1)
    # nn.Embedding default: N(0, 1)
    embedding = jax.random.normal(ks[8], (opt.n_classes, opt.label_dim), jnp.float32)

    # Split W1 along its input rows (img rows first, matching the concat order),
    # pad W4/b4 to OUT_PAD lanes; matmul operands stored bf16, biases f32.
    w1_img = w1[:d_img].astype(jnp.bfloat16)
    w1_emb = w1[d_img:].astype(jnp.bfloat16)
    w4_pad = jnp.zeros((HIDDEN, OUT_PAD), jnp.float32).at[:, :1].set(w4)
    b4_pad = jnp.zeros((1, OUT_PAD), jnp.float32).at[:, :1].set(b4)

    return dict(embedding=embedding,
                w1_img=w1_img, w1_emb=w1_emb, b1=b1,
                w2=w2.astype(jnp.bfloat16), b2=b2,
                w3=w3.astype(jnp.bfloat16), b3=b3,
                w4_pad=w4_pad.astype(jnp.bfloat16), b4_pad=b4_pad)


# ----------------------- pure-JAX reference (same recipe) -------------------
def reference_forward(img, labels, params):
    B = img.shape[0]
    emb = params["embedding"][labels].astype(jnp.bfloat16)
    img_flat = img.reshape(B, -1).astype(jnp.bfloat16)
    h = (jnp.dot(img_flat, params["w1_img"], preferred_element_type=jnp.float32)
         + jnp.dot(emb, params["w1_emb"], preferred_element_type=jnp.float32)
         + params["b1"])
    h = _leaky_relu(h)
    h = jnp.dot(h.astype(jnp.bfloat16), params["w2"],
                preferred_element_type=jnp.float32) + params["b2"]
    h = _leaky_relu(h)
    h = jnp.dot(h.astype(jnp.bfloat16), params["w3"],
                preferred_element_type=jnp.float32) + params["b3"]
    h = _leaky_relu(h)
    z = jnp.dot(h.astype(jnp.bfloat16), params["w4_pad"],
                preferred_element_type=jnp.float32) + params["b4_pad"]
    return jax.nn.sigmoid(z)[:, :1]


# ----------------------------------- main -----------------------------------
if __name__ == "__main__":
    opt = Opt()
    key = jax.random.PRNGKey(0)
    k_param, k_img, k_lbl = jax.random.split(key, 3)

    params = init_params(opt, k_param)

    B = 2
    img = jax.random.normal(k_img, (B, opt.channels, opt.img_size, opt.img_size),
                            jnp.float32)
    labels = jax.random.randint(k_lbl, (B,), 0, opt.n_classes, jnp.int32)

    validity = discriminator1_forward(img, labels, params)
    jax.block_until_ready(validity)

    ref = reference_forward(img, labels, params)

    assert validity.shape == (B, 1)
    assert bool(jnp.all((validity >= 0.0) & (validity <= 1.0)))
    assert bool(jnp.allclose(validity, ref, atol=1e-3, rtol=1e-3))
    print("KERNEL_OK")
</pallas_src>

<mosaic_0001>
module attributes {stable_mosaic.version = 11 : i64} {
  func.func @mlp_kernel(%arg0: i32, %arg1: memref<8x64xbf16, #tpu.memory_space<vmem>>, %arg2: memref<8x16xbf16, #tpu.memory_space<vmem>>, %arg3: memref<64x256xbf16, #tpu.memory_space<vmem>>, %arg4: memref<16x256xbf16, #tpu.memory_space<vmem>>, %arg5: memref<1x256xf32, #tpu.memory_space<vmem>>, %arg6: memref<256x256xbf16, #tpu.memory_space<vmem>>, %arg7: memref<1x256xf32, #tpu.memory_space<vmem>>, %arg8: memref<256x256xbf16, #tpu.memory_space<vmem>>, %arg9: memref<1x256xf32, #tpu.memory_space<vmem>>, %arg10: memref<256x128xbf16, #tpu.memory_space<vmem>>, %arg11: memref<1x128xf32, #tpu.memory_space<vmem>>, %arg12: memref<8x128xf32, #tpu.memory_space<vmem>>) attributes {dimension_semantics = [#tpu.dimension_semantics<parallel>], iteration_bounds = array<i64: 1>, scalar_prefetch = 0 : i64, scratch_operands = 0 : i64, tpu.core_type = #tpu.core_type<tc>, window_params = [{transform_indices = @transform_0, window_bounds = array<i64: 8, 64>}, {transform_indices = @transform_1, window_bounds = array<i64: 8, 16>}, {pipeline_mode = #tpu.pipeline_mode<synchronous>, transform_indices = @transform_2, window_bounds = array<i64: 64, 256>}, {pipeline_mode = #tpu.pipeline_mode<synchronous>, transform_indices = @transform_3, window_bounds = array<i64: 16, 256>}, {pipeline_mode = #tpu.pipeline_mode<synchronous>, transform_indices = @transform_4, window_bounds = array<i64: 1, 256>}, {pipeline_mode = #tpu.pipeline_mode<synchronous>, transform_indices = @transform_5, window_bounds = array<i64: 256, 256>}, {pipeline_mode = #tpu.pipeline_mode<synchronous>, transform_indices = @transform_6, window_bounds = array<i64: 1, 256>}, {pipeline_mode = #tpu.pipeline_mode<synchronous>, transform_indices = @transform_7, window_bounds = array<i64: 256, 256>}, {pipeline_mode = #tpu.pipeline_mode<synchronous>, transform_indices = @transform_8, window_bounds = array<i64: 1, 256>}, {pipeline_mode = #tpu.pipeline_mode<synchronous>, transform_indices = @transform_9, window_bounds = array<i64: 256, 128>}, {pipeline_mode = #tpu.pipeline_mode<synchronous>, transform_indices = @transform_10, window_bounds = array<i64: 1, 128>}, {transform_indices = @transform_11, window_bounds = array<i64: 8, 128>}]} {
    %c0 = arith.constant 0 : index
    %c0_0 = arith.constant 0 : index
    %0 = vector.load %arg1[%c0, %c0_0] : memref<8x64xbf16, #tpu.memory_space<vmem>>, vector<8x64xbf16>
    %c0_1 = arith.constant 0 : index
    %c0_2 = arith.constant 0 : index
    %1 = vector.load %arg3[%c0_1, %c0_2] : memref<64x256xbf16, #tpu.memory_space<vmem>>, vector<64x256xbf16>
    %cst = arith.constant dense<0.000000e+00> : vector<8x256xf32>
    %2 = tpu.matmul %0, %1, %cst {dimension_numbers = #tpu.dot_dimension_numbers<[1], [0], [0], [1], [0, 0, 1, 1], [], []>} : vector<8x64xbf16>, vector<64x256xbf16>, vector<8x256xf32> -> vector<8x256xf32>
    %c0_3 = arith.constant 0 : index
    %c0_4 = arith.constant 0 : index
    %3 = vector.load %arg2[%c0_3, %c0_4] : memref<8x16xbf16, #tpu.memory_space<vmem>>, vector<8x16xbf16>
    %c0_5 = arith.constant 0 : index
    %c0_6 = arith.constant 0 : index
    %4 = vector.load %arg4[%c0_5, %c0_6] : memref<16x256xbf16, #tpu.memory_space<vmem>>, vector<16x256xbf16>
    %cst_7 = arith.constant dense<0.000000e+00> : vector<8x256xf32>
    %5 = tpu.matmul %3, %4, %cst_7 {dimension_numbers = #tpu.dot_dimension_numbers<[1], [0], [0], [1], [0, 0, 1, 1], [], []>} : vector<8x16xbf16>, vector<16x256xbf16>, vector<8x256xf32> -> vector<8x256xf32>
    %6 = arith.addf %2, %5 : vector<8x256xf32>
    %c0_8 = arith.constant 0 : index
    %c0_9 = arith.constant 0 : index
    %7 = vector.load %arg5[%c0_8, %c0_9] : memref<1x256xf32, #tpu.memory_space<vmem>>, vector<1x256xf32>
    %8 = vector.broadcast %7 : vector<1x256xf32> to vector<8x256xf32>
    %9 = arith.addf %6, %8 : vector<8x256xf32>
    %cst_10 = arith.constant 0.000000e+00 : f32
    %10 = vector.broadcast %cst_10 : f32 to vector<8x256xf32>
    %11 = arith.cmpf ogt, %9, %10 : vector<8x256xf32>
    %cst_11 = arith.constant 2.000000e-01 : f32
    %12 = vector.broadcast %cst_11 : f32 to vector<8x256xf32>
    %13 = arith.mulf %12, %9 : vector<8x256xf32>
    %14 = arith.select %11, %9, %13 : vector<8x256xi1>, vector<8x256xf32>
    %15 = arith.truncf %14 : vector<8x256xf32> to vector<8x256xbf16>
    %c0_12 = arith.constant 0 : index
    %c0_13 = arith.constant 0 : index
    %16 = vector.load %arg6[%c0_12, %c0_13] : memref<256x256xbf16, #tpu.memory_space<vmem>>, vector<256x256xbf16>
    %cst_14 = arith.constant dense<0.000000e+00> : vector<8x256xf32>
    %17 = tpu.matmul %15, %16, %cst_14 {dimension_numbers = #tpu.dot_dimension_numbers<[1], [0], [0], [1], [0, 0, 1, 1], [], []>} : vector<8x256xbf16>, vector<256x256xbf16>, vector<8x256xf32> -> vector<8x256xf32>
    %c0_15 = arith.constant 0 : index
    %c0_16 = arith.constant 0 : index
    %18 = vector.load %arg7[%c0_15, %c0_16] : memref<1x256xf32, #tpu.memory_space<vmem>>, vector<1x256xf32>
    %19 = vector.broadcast %18 : vector<1x256xf32> to vector<8x256xf32>
    %20 = arith.addf %17, %19 : vector<8x256xf32>
    %cst_17 = arith.constant 0.000000e+00 : f32
    %21 = vector.broadcast %cst_17 : f32 to vector<8x256xf32>
    %22 = arith.cmpf ogt, %20, %21 : vector<8x256xf32>
    %cst_18 = arith.constant 2.000000e-01 : f32
    %23 = vector.broadcast %cst_18 : f32 to vector<8x256xf32>
    %24 = arith.mulf %23, %20 : vector<8x256xf32>
    %25 = arith.select %22, %20, %24 : vector<8x256xi1>, vector<8x256xf32>
    %26 = arith.truncf %25 : vector<8x256xf32> to vector<8x256xbf16>
    %c0_19 = arith.constant 0 : index
    %c0_20 = arith.constant 0 : index
    %27 = vector.load %arg8[%c0_19, %c0_20] : memref<256x256xbf16, #tpu.memory_space<vmem>>, vector<256x256xbf16>
    %cst_21 = arith.constant dense<0.000000e+00> : vector<8x256xf32>
    %28 = tpu.matmul %26, %27, %cst_21 {dimension_numbers = #tpu.dot_dimension_numbers<[1], [0], [0], [1], [0, 0, 1, 1], [], []>} : vector<8x256xbf16>, vector<256x256xbf16>, vector<8x256xf32> -> vector<8x256xf32>
    %c0_22 = arith.constant 0 : index
    %c0_23 = arith.constant 0 : index
    %29 = vector.load %arg9[%c0_22, %c0_23] : memref<1x256xf32, #tpu.memory_space<vmem>>, vector<1x256xf32>
    %30 = vector.broadcast %29 : vector<1x256xf32> to vector<8x256xf32>
    %31 = arith.addf %28, %30 : vector<8x256xf32>
    %cst_24 = arith.constant 0.000000e+00 : f32
    %32 = vector.broadcast %cst_24 : f32 to vector<8x256xf32>
    %33 = arith.cmpf ogt, %31, %32 : vector<8x256xf32>
    %cst_25 = arith.constant 2.000000e-01 : f32
    %34 = vector.broadcast %cst_25 : f32 to vector<8x256xf32>
    %35 = arith.mulf %34, %31 : vector<8x256xf32>
    %36 = arith.select %33, %31, %35 : vector<8x256xi1>, vector<8x256xf32>
    %37 = arith.truncf %36 : vector<8x256xf32> to vector<8x256xbf16>
    %c0_26 = arith.constant 0 : index
    %c0_27 = arith.constant 0 : index
    %38 = vector.load %arg10[%c0_26, %c0_27] : memref<256x128xbf16, #tpu.memory_space<vmem>>, vector<256x128xbf16>
    %cst_28 = arith.constant dense<0.000000e+00> : vector<8x128xf32>
    %39 = tpu.matmul %37, %38, %cst_28 {dimension_numbers = #tpu.dot_dimension_numbers<[1], [0], [0], [1], [0, 0, 1, 1], [], []>} : vector<8x256xbf16>, vector<256x128xbf16>, vector<8x128xf32> -> vector<8x128xf32>
    %c0_29 = arith.constant 0 : index
    %c0_30 = arith.constant 0 : index
    %40 = vector.load %arg11[%c0_29, %c0_30] : memref<1x128xf32, #tpu.memory_space<vmem>>, vector<1x128xf32>
    %41 = vector.broadcast %40 : vector<1x128xf32> to vector<8x128xf32>
    %42 = arith.addf %39, %41 : vector<8x128xf32>
    %43 = arith.negf %42 : vector<8x128xf32>
    %44 = math.exp %43 : vector<8x128xf32>
    %cst_31 = arith.constant 1.000000e+00 : f32
    %45 = vector.broadcast %cst_31 : f32 to vector<8x128xf32>
    %46 = arith.addf %45, %44 : vector<8x128xf32>
    %47 = arith.divf %45, %46 : vector<8x128xf32>
    %c0_32 = arith.constant 0 : index
    %c0_33 = arith.constant 0 : index
    %48 = vector.load %arg12[%c0_32, %c0_33] : memref<8x128xf32, #tpu.memory_space<vmem>>, vector<8x128xf32>
    tpu.vector_store %arg12[%c0_32, %c0_33], %47 {strides = array<i32>} : memref<8x128xf32, #tpu.memory_space<vmem>>, vector<8x128xf32>,
    return
  }
  func.func @transform_0(%arg0: i32) -> (i32, i32) {
    %c0_i32 = arith.constant 0 : i32
    %c0_i32_0 = arith.constant 0 : i32
    return %arg0, %c0_i32 : i32, i32
  }
  func.func @transform_1(%arg0: i32) -> (i32, i32) {
    %c0_i32 = arith.constant 0 : i32
    %c0_i32_0 = arith.constant 0 : i32
    return %arg0, %c0_i32 : i32, i32
  }
  func.func @transform_2(%arg0: i32) -> (i32, i32) {
    %c0_i32 = arith.constant 0 : i32
    %c0_i32_0 = arith.constant 0 : i32
    %c0_i32_1 = arith.constant 0 : i32
    return %c0_i32, %c0_i32_0 : i32, i32
  }
  func.func @transform_3(%arg0: i32) -> (i32, i32) {
    %c0_i32 = arith.constant 0 : i32
    %c0_i32_0 = arith.constant 0 : i32
    %c0_i32_1 = arith.constant 0 : i32
    return %c0_i32, %c0_i32_0 : i32, i32
  }
  func.func @transform_4(%arg0: i32) -> (i32, i32) {
    %c0_i32 = arith.constant 0 : i32
    %c0_i32_0 = arith.constant 0 : i32
    %c0_i32_1 = arith.constant 0 : i32
    return %c0_i32, %c0_i32_0 : i32, i32
  }
  func.func @transform_5(%arg0: i32) -> (i32, i32) {
    %c0_i32 = arith.constant 0 : i32
    %c0_i32_0 = arith.constant 0 : i32
    %c0_i32_1 = arith.constant 0 : i32
    return %c0_i32, %c0_i32_0 : i32, i32
  }
  func.func @transform_6(%arg0: i32) -> (i32, i32) {
    %c0_i32 = arith.constant 0 : i32
    %c0_i32_0 = arith.constant 0 : i32
    %c0_i32_1 = arith.constant 0 : i32
    return %c0_i32, %c0_i32_0 : i32, i32
  }
  func.func @transform_7(%arg0: i32) -> (i32, i32) {
    %c0_i32 = arith.constant 0 : i32
    %c0_i32_0 = arith.constant 0 : i32
    %c0_i32_1 = arith.constant 0 : i32
    return %c0_i32, %c0_i32_0 : i32, i32
  }
  func.func @transform_8(%arg0: i32) -> (i32, i32) {
    %c0_i32 = arith.constant 0 : i32
    %c0_i32_0 = arith.constant 0 : i32
    %c0_i32_1 = arith.constant 0 : i32
    return %c0_i32, %c0_i32_0 : i32, i32
  }
  func.func @transform_9(%arg0: i32) -> (i32, i32) {
    %c0_i32 = arith.constant 0 : i32
    %c0_i32_0 = arith.constant 0 : i32
    %c0_i32_1 = arith.constant 0 : i32
    return %c0_i32, %c0_i32_0 : i32, i32
  }
  func.func @transform_10(%arg0: i32) -> (i32, i32) {
    %c0_i32 = arith.constant 0 : i32
    %c0_i32_0 = arith.constant 0 : i32
    %c0_i32_1 = arith.constant 0 : i32
    return %c0_i32, %c0_i32_0 : i32, i32
  }
  func.func @transform_11(%arg0: i32) -> (i32, i32) {
    %c0_i32 = arith.constant 0 : i32
    %c0_i32_0 = arith.constant 0 : i32
    return %arg0, %c0_i32 : i32, i32
  }
}

</mosaic_0001>

<llo_original>
// kernel: discriminator1_forward.1
$region0: #{discriminator1_forward.1}
  #allocation0 [shape = 'u32[]', space=smem, size = 0x4, offset = 0x4, fixed_abs, tag = 'smem constant byte address 0x4 - core index']
  #allocation1 [shape = 'u32[144,128]{1,0:T(1,128)}', space=vmem, size = 0x12000, scoped, tag = 'internal scratch']
  %s0 = inlined_call_operand.vmem [shape: bf16[8,64], index: 0, kind: input, shape index: {}]
  %s1 = inlined_call_operand.vmem [shape: bf16[8,16], index: 1, kind: input, shape index: {}]
  %s2 = inlined_call_operand.vmem [shape: bf16[64,256], index: 2, kind: input, shape index: {}]
  %s3 = inlined_call_operand.vmem [shape: bf16[16,256], index: 3, kind: input, shape index: {}]
  %s4 = inlined_call_operand.vmem [shape: f32[1,256], index: 4, kind: input, shape index: {}]
  %s5 = inlined_call_operand.hbm [shape: bf16[256,256], index: 5, kind: input, shape index: {}]
  %s6 = inlined_call_operand.vmem [shape: f32[1,256], index: 6, kind: input, shape index: {}]
  %s7 = inlined_call_operand.hbm [shape: bf16[256,256], index: 7, kind: input, shape index: {}]
  %s8 = inlined_call_operand.vmem [shape: f32[1,256], index: 8, kind: input, shape index: {}]
  %s9 = inlined_call_operand.hbm [shape: bf16[256,128], index: 9, kind: input, shape index: {}]
  %s10 = inlined_call_operand.vmem [shape: f32[1,128], index: 10, kind: input, shape index: {}]
  %s11 = inlined_call_operand.vmem [shape: f32[8,128], index: 11, kind: output, shape index: {}]
  %s12 = sld [smem:[#allocation0]]
  $region66: #{discriminator1_forward.1} parent=0
    _
  %s14 = ssub.s32 1, %s12
  %s15 = scalar_select 0, %s14, %s12
  $region1: #{discriminator1_forward.1} parent=0
    #allocation2 [shape = 'u8[131072]{0}', space=vmem, size = 0x20000, scoped, tag = 'input window, operand 5, single buffered']
    #allocation3 [shape = 's32[1]{0}', space=sflag, size = 0x4, scoped, tag = 'scoped memory for discriminator1_forward.1']
    #allocation4 [shape = 'u8[131072]{0}', space=vmem, size = 0x20000, scoped, tag = 'input window, operand 7, single buffered']
    #allocation5 [shape = 's32[1]{0}', space=sflag, size = 0x4, scoped, tag = 'scoped memory for discriminator1_forward.1']
    #allocation6 [shape = 'u8[65536]{0}', space=vmem, size = 0x10000, scoped, tag = 'input window, operand 9, single buffered']
    %16 = vsyncpa [#allocation3], 0
    %17 = vsyncpa [#allocation5], 0
    // Predicated region
    $region2: #{discriminator1_forward.1} parent=1 // pred_check
      _
    $region3: #{discriminator1_forward.1} parent=1 // pred_check_branch
      %19 = sbr.rel (0) target = $region5
    $region4: #{discriminator1_forward.1} parent=1 // pred_region
      _
    $region5: #{discriminator1_forward.1} parent=1 // pred_fallthru
      _
    // Predicated region
    $region6: #{discriminator1_forward.1} parent=1 // pred_check
      _
    $region7: #{discriminator1_forward.1} parent=1 // pred_check_branch
      %21 = sbr.rel (0) target = $region9
    $region8: #{discriminator1_forward.1} parent=1 // pred_region
      _
    $region9: #{discriminator1_forward.1} parent=1 // pred_fallthru
      _
    // Predicated region
    $region10: #{discriminator1_forward.1} parent=1 // pred_check
      _
    $region11: #{discriminator1_forward.1} parent=1 // pred_check_branch
      %23 = sbr.rel (0) target = $region13
    $region12: #{discriminator1_forward.1} parent=1 // pred_region
      _
    $region13: #{discriminator1_forward.1} parent=1 // pred_fallthru
      _
    // Predicated region
    $region14: #{discriminator1_forward.1} parent=1 // pred_check
      _
    $region15: #{discriminator1_forward.1} parent=1 // pred_check_branch
      %25 = sbr.rel (0) target = $region17
    $region16: #{discriminator1_forward.1} parent=1 // pred_region
      _
    $region17: #{discriminator1_forward.1} parent=1 // pred_fallthru
      _
    // Predicated region
    $region18: #{discriminator1_forward.1} parent=1 // pred_check
      _
    $region19: #{discriminator1_forward.1} parent=1 // pred_check_branch
      %27 = sbr.rel (0) target = $region21
    $region20: #{discriminator1_forward.1} parent=1 // pred_region
      _
    $region21: #{discriminator1_forward.1} parent=1 // pred_fallthru
      _
    // Predicated region
    $region22: #{discriminator1_forward.1} parent=1 // pred_check
      _
    $region23: #{discriminator1_forward.1} parent=1 // pred_check_branch
      %29 = sbr.rel (0) target = $region25
    $region24: #{discriminator1_forward.1} parent=1 // pred_region
      %s31 = ssub.s32 4096, 4096
      %32 = vsyncadd [#allocation3], %s31
      %s33 = sshll.u32 [#allocation2], 4
      %s34 = int_to_ptr.vmem [resolvable:$true] %s33
      %39 = dma.hbm_to_vmem [thread:$0]  %s5, 4096, %s34, [#allocation3], 128, 128, 8
    $region25: #{discriminator1_forward.1} parent=1 // pred_fallthru
      _
    // Predicated region
    $region26: #{discriminator1_forward.1} parent=1 // pred_check
      _
    $region27: #{discriminator1_forward.1} parent=1 // pred_check_branch
      %41 = sbr.rel (0) target = $region29
    $region28: #{discriminator1_forward.1} parent=1 // pred_region
      _
    $region29: #{discriminator1_forward.1} parent=1 // pred_fallthru
      _
    // Predicated region
    $region30: #{discriminator1_forward.1} parent=1 // pred_check
      _
    $region31: #{discriminator1_forward.1} parent=1 // pred_check_branch
      %43 = sbr.rel (0) target = $region33
    $region32: #{discriminator1_forward.1} parent=1 // pred_region
      %s45 = ssub.s32 4096, 4096
      %46 = vsyncadd [#allocation5], %s45
      %s47 = sshll.u32 [#allocation4], 4
      %s48 = int_to_ptr.vmem [resolvable:$true] %s47
      %53 = dma.hbm_to_vmem [thread:$0]  %s7, 4096, %s48, [#allocation5], 128, 128, 8
    $region33: #{discriminator1_forward.1} parent=1 // pred_fallthru
      _
    // Predicated region
    $region34: #{discriminator1_forward.1} parent=1 // pred_check
      _
    $region35: #{discriminator1_forward.1} parent=1 // pred_check_branch
      %55 = sbr.rel (0) target = $region37
    $region36: #{discriminator1_forward.1} parent=1 // pred_region
      _
    $region37: #{discriminator1_forward.1} parent=1 // pred_fallthru
      _
    // Predicated region
    $region38: #{discriminator1_forward.1} parent=1 // pred_check
      _
    $region39: #{discriminator1_forward.1} parent=1 // pred_check_branch
      %57 = sbr.rel (0) target = $region41
    $region40: #{discriminator1_forward.1} parent=1 // pred_region
      %s59 = ssub.s32 2048, 2048
      %60 = vsyncadd [#allocation5], %s59
      %s61 = sshll.u32 [#allocation6], 4
      %s62 = int_to_ptr.vmem [resolvable:$true] %s61
      %67 = dma.hbm_to_vmem [thread:$0]  %s9, 2048, %s62, [#allocation5], 64, 64, 4
    $region41: #{discriminator1_forward.1} parent=1 // pred_fallthru
      _
    // Predicated region
    $region42: #{discriminator1_forward.1} parent=1 // pred_check
      _
    $region43: #{discriminator1_forward.1} parent=1 // pred_check_branch
      %69 = sbr.rel (0) target = $region45
    $region44: #{discriminator1_forward.1} parent=1 // pred_region
      _
    $region45: #{discriminator1_forward.1} parent=1 // pred_fallthru
      _
    // Predicated region
    $region46: #{discriminator1_forward.1} parent=1 // pred_check
      _
    $region47: #{discriminator1_forward.1} parent=1 // pred_check_branch
      %71 = sbr.rel (0) target = $region49
    $region48: #{discriminator1_forward.1} parent=1 // pred_region
      %72 = dma.done [#allocation3], 4096
    $region49: #{discriminator1_forward.1} parent=1 // pred_fallthru
      _
    // Predicated region
    $region50: #{discriminator1_forward.1} parent=1 // pred_check
      _
    $region51: #{discriminator1_forward.1} parent=1 // pred_check_branch
      %74 = sbr.rel (0) target = $region53
    $region52: #{discriminator1_forward.1} parent=1 // pred_region
      %75 = dma.done [#allocation5], 4096
    $region53: #{discriminator1_forward.1} parent=1 // pred_fallthru
      _
    // Predicated region
    $region54: #{discriminator1_forward.1} parent=1 // pred_check
      _
    $region55: #{discriminator1_forward.1} parent=1 // pred_check_branch
      %77 = sbr.rel (0) target = $region57
    $region56: #{discriminator1_forward.1} parent=1 // pred_region
      %78 = dma.done [#allocation5], 2048
    $region57: #{discriminator1_forward.1} parent=1 // pred_fallthru
      _
    %v80 = vld [vmem:[%s0] sm:$0xf]
    %v81 = vld [vmem:[%s2] sm:$0xff]
    %v82 = vld [vmem:[%s2 + $0x8] sm:$0xff]
    %v83 = vld [vmem:[%s2 + $0x10] sm:$0xff]
    %v84 = vld [vmem:[%s2 + $0x18] sm:$0xff]
    %v85 = vld [vmem:[%s2 + $0x20] sm:$0xff]
    %v86 = vld [vmem:[%s2 + $0x28] sm:$0xff]
    %v87 = vld [vmem:[%s2 + $0x30] sm:$0xff]
    %v88 = vld [vmem:[%s2 + $0x38] sm:$0xff]
    %v89 = vld [vmem:[%s1] sm:$0xf]
    %v90 = vld [vmem:[%s3] sm:$0xff]
    %v91 = vld [vmem:[%s3 + $0x8] sm:$0xff]
    %v94 = vunpack.c.l.b16 %v90
    %v95 = vunpack.c.h.b16 %v90
    %v96 = vunpack.c.l.b16 %v91
    %v97 = vunpack.c.h.b16 %v91
    %v98 = vpack.c.b16 %v96, %v94
    %v99 = vpack.c.b16 %v97, %v95
    %vm102 = vcmask 130048
    %v104 = vsel %vm102, %v89, 0
    %106 = vmatprep.subr.bf16.mxu0 %v99
    %107 = vmatpush1.bf16.msra.mxu0 %v98
    %108 = vmatprep.subr.bf16.mxu0 0
    %109 = vmatpush1.bf16.msra.mxu0 0
    %110 = vmatprep.subr.bf16.mxu0 0
    %111 = vmatpush1.bf16.msra.mxu0 0
    %112 = vmatprep.subr.bf16.mxu0 0
    %113 = vmatpush1.bf16.msra.mxu0 0
    %114 = vmatprep.subr.bf16.mxu0 0
    %115 = vmatpush1.bf16.msra.mxu0 0
    %116 = vmatprep.subr.bf16.mxu0 0
    %117 = vmatpush1.bf16.msra.mxu0 0
    %118 = vmatprep.subr.bf16.mxu0 0
    %119 = vmatpush1.bf16.msra.mxu0 0
    %120 = vmatprep.subr.bf16.mxu0 0
    %121 = vmatpush1.bf16.msra.mxu0 0
    %122 = vmatprep.subr.bf16.mxu0 0
    %123 = vmatpush1.bf16.msra.mxu0 0
    %124 = vmatprep.subr.bf16.mxu0 0
    %125 = vmatpush1.bf16.msra.mxu0 0
    %126 = vmatprep.subr.bf16.mxu0 0
    %127 = vmatpush1.bf16.msra.mxu0 0
    %128 = vmatprep.subr.bf16.mxu0 0
    %129 = vmatpush1.bf16.msra.mxu0 0
    %130 = vmatprep.subr.bf16.mxu0 0
    %131 = vmatpush1.bf16.msra.mxu0 0
    %132 = vmatprep.subr.bf16.mxu0 0
    %133 = vmatpush1.bf16.msra.mxu0 0
    %134 = vmatprep.subr.bf16.mxu0 0
    %135 = vmatpush1.bf16.msra.mxu0 0
    %136 = vmatprep.subr.bf16.mxu0 0
    %137 = vmatpush1.bf16.msra.mxu0 0
    %138 = vmatprep.mubr.bf16.mxu0 0
    %139 = vmatmul.mubr.bf16.gmra.mrb[0].mxu0 %v104
    %v140 = vpop.f32.mrb[0].mxu0
    %v141 = vadd.f32 0.0, %v140
    %v142 = vpop.f32.mrb[0].mxu0
    %v143 = vadd.f32 0.0, %v142
    %v144 = vpop.f32.mrb[0].mxu0
    %v145 = vpop.f32.mrb[0].mxu0
    %146 = vdwg.mxu0
    %v155 = vunpack.c.l.b16 %v81
    %v156 = vunpack.c.h.b16 %v81
    %v157 = vunpack.c.l.b16 %v82
    %v158 = vunpack.c.h.b16 %v82
    %v159 = vunpack.c.l.b16 %v83
    %v160 = vunpack.c.h.b16 %v83
    %v161 = vunpack.c.l.b16 %v84
    %v162 = vunpack.c.h.b16 %v84
    %v163 = vunpack.c.l.b16 %v85
    %v164 = vunpack.c.h.b16 %v85
    %v165 = vunpack.c.l.b16 %v86
    %v166 = vunpack.c.h.b16 %v86
    %v167 = vunpack.c.l.b16 %v87
    %v168 = vunpack.c.h.b16 %v87
    %v169 = vunpack.c.l.b16 %v88
    %v170 = vunpack.c.h.b16 %v88
    %v171 = vpack.c.b16 %v157, %v155
    %v172 = vpack.c.b16 %v158, %v156
    %v173 = vpack.c.b16 %v161, %v159
    %v174 = vpack.c.b16 %v162, %v160
    %v175 = vpack.c.b16 %v165, %v163
    %v176 = vpack.c.b16 %v166, %v164
    %v177 = vpack.c.b16 %v169, %v167
    %v178 = vpack.c.b16 %v170, %v168
    %vm187 = vcmask 523264
    %v189 = vsel %vm187, %v80, 0
    %191 = vmatprep.subr.bf16.mxu0 %v172
    %192 = vmatpush1.bf16.msra.mxu0 %v171
    %193 = vmatprep.subr.bf16.mxu0 %v174
    %194 = vmatpush1.bf16.msra.mxu0 %v173
    %195 = vmatprep.subr.bf16.mxu0 %v176
    %196 = vmatpush1.bf16.msra.mxu0 %v175
    %197 = vmatprep.subr.bf16.mxu0 %v178
    %198 = vmatpush1.bf16.msra.mxu0 %v177
    %199 = vmatprep.subr.bf16.mxu0 0
    %200 = vmatpush1.bf16.msra.mxu0 0
    %201 = vmatprep.subr.bf16.mxu0 0
    %202 = vmatpush1.bf16.msra.mxu0 0
    %203 = vmatprep.subr.bf16.mxu0 0
    %204 = vmatpush1.bf16.msra.mxu0 0
    %205 = vmatprep.subr.bf16.mxu0 0
    %206 = vmatpush1.bf16.msra.mxu0 0
    %207 = vmatprep.subr.bf16.mxu0 0
    %208 = vmatpush1.bf16.msra.mxu0 0
    %209 = vmatprep.subr.bf16.mxu0 0
    %210 = vmatpush1.bf16.msra.mxu0 0
    %211 = vmatprep.subr.bf16.mxu0 0
    %212 = vmatpush1.bf16.msra.mxu0 0
    %213 = vmatprep.subr.bf16.mxu0 0
    %214 = vmatpush1.bf16.msra.mxu0 0
    %215 = vmatprep.subr.bf16.mxu0 0
    %216 = vmatpush1.bf16.msra.mxu0 0
    %217 = vmatprep.subr.bf16.mxu0 0
    %218 = vmatpush1.bf16.msra.mxu0 0
    %219 = vmatprep.subr.bf16.mxu0 0
    %220 = vmatpush1.bf16.msra.mxu0 0
    %221 = vmatprep.subr.bf16.mxu0 0
    %222 = vmatpush1.bf16.msra.mxu0 0
    %223 = vmatprep.mubr.bf16.mxu0 0
    %224 = vmatmul.mubr.bf16.gmra.mrb[0].mxu0 %v189
    %v225 = vpop.f32.mrb[0].mxu0
    %v226 = vadd.f32 %v141, %v225
    %v227 = vpop.f32.mrb[0].mxu0
    %v228 = vadd.f32 %v143, %v227
    %v229 = vpop.f32.mrb[0].mxu0
    %v230 = vpop.f32.mrb[0].mxu0
    %231 = vdwg.mxu0
    %v232 = vld [vmem:[%s4] sm:$0x3]
    %v234 = vlaneseq
    %v235 = vshrl.u32 %v234, 7
    %v236 = vsub.s32 0, %v235
    %v237 = vrot.slane %v232, %v236
    %v238 = vlaneseq
    %v239 = vshrl.u32 %v238, 7
    %v240 = vsub.s32 1, %v239
    %v241 = vrot.slane %v232, %v240
    %v244 = vadd.f32 %v226, %v237
    %v245 = vadd.f32 %v228, %v241
    %vm246 = vcmp.gt.f32.partialorder %v244, 0.0
    %vm247 = vcmp.gt.f32.partialorder %v245, 0.0
    %v248 = vmul.f32 %v244, 0.2
    %v249 = vmul.f32 %v245, 0.2
    %v250 = vsel %vm246, %v244, %v248
    %v251 = vsel %vm247, %v245, %v249
    %v252 = vpack.c.bf16 %v250, %v250
    %v253 = vpack.c.bf16 %v251, %v251
    %v254 = vld [vmem:[#allocation2] sm:$0xff]
    %v255 = vld [vmem:[#allocation2 + $0x8] sm:$0xff]
    %v256 = vld [vmem:[#allocation2 + $0x10] sm:$0xff]
    %v257 = vld [vmem:[#allocation2 + $0x18] sm:$0xff]
    %v258 = vld [vmem:[#allocation2 + $0x20] sm:$0xff]
    %v259 = vld [vmem:[#allocation2 + $0x28] sm:$0xff]
    %v260 = vld [vmem:[#allocation2 + $0x30] sm:$0xff]
    %v261 = vld [vmem:[#allocation2 + $0x38] sm:$0xff]
    %v262 = vld [vmem:[#allocation2 + $0x40] sm:$0xff]
    %v263 = vld [vmem:[#allocation2 + $0x48] sm:$0xff]
    %v264 = vld [vmem:[#allocation2 + $0x50] sm:$0xff]
    %v265 = vld [vmem:[#allocation2 + $0x58] sm:$0xff]
    %v266 = vld [vmem:[#allocation2 + $0x60] sm:$0xff]
    %v267 = vld [vmem:[#allocation2 + $0x68] sm:$0xff]
    %v268 = vld [vmem:[#allocation2 + $0x70] sm:$0xff]
    %v269 = vld [vmem:[#allocation2 + $0x78] sm:$0xff]
    %v270 = vld [vmem:[#allocation2 + $0x80] sm:$0xff]
    %v271 = vld [vmem:[#allocation2 + $0x88] sm:$0xff]
    %v272 = vld [vmem:[#allocation2 + $0x90] sm:$0xff]
    %v273 = vld [vmem:[#allocation2 + $0x98] sm:$0xff]
    %v274 = vld [vmem:[#allocation2 + $0xa0] sm:$0xff]
    %v275 = vld [vmem:[#allocation2 + $0xa8] sm:$0xff]
    %v276 = vld [vmem:[#allocation2 + $0xb0] sm:$0xff]
    %v277 = vld [vmem:[#allocation2 + $0xb8] sm:$0xff]
    %v278 = vld [vmem:[#allocation2 + $0xc0] sm:$0xff]
    %v279 = vld [vmem:[#allocation2 + $0xc8] sm:$0xff]
    %v280 = vld [vmem:[#allocation2 + $0xd0] sm:$0xff]
    %v281 = vld [vmem:[#allocation2 + $0xd8] sm:$0xff]
    %v282 = vld [vmem:[#allocation2 + $0xe0] sm:$0xff]
    %v283 = vld [vmem:[#allocation2 + $0xe8] sm:$0xff]
    %v284 = vld [vmem:[#allocation2 + $0xf0] sm:$0xff]
    %v285 = vld [vmem:[#allocation2 + $0xf8] sm:$0xff]
    %v286 = vld [vmem:[%s6] sm:$0x3]
    %v288 = vlaneseq
    %v289 = vshrl.u32 %v288, 7
    %v290 = vsub.s32 0, %v289
    %v291 = vrot.slane %v286, %v290
    %v292 = vlaneseq
    %v293 = vshrl.u32 %v292, 7
    %v294 = vsub.s32 1, %v293
    %v295 = vrot.slane %v286, %v294
    %v330 = vunpack.c.l.b16 %v254
    %v331 = vunpack.c.h.b16 %v254
    %v332 = vunpack.c.l.b16 %v255
    %v333 = vunpack.c.h.b16 %v255
    %v334 = vunpack.c.l.b16 %v256
    %v335 = vunpack.c.h.b16 %v256
    %v336 = vunpack.c.l.b16 %v257
    %v337 = vunpack.c.h.b16 %v257
    %v338 = vunpack.c.l.b16 %v258
    %v339 = vunpack.c.h.b16 %v258
    %v340 = vunpack.c.l.b16 %v259
    %v341 = vunpack.c.h.b16 %v259
    %v342 = vunpack.c.l.b16 %v260
    %v343 = vunpack.c.h.b16 %v260
    %v344 = vunpack.c.l.b16 %v261
    %v345 = vunpack.c.h.b16 %v261
    %v346 = vunpack.c.l.b16 %v262
    %v347 = vunpack.c.h.b16 %v262
    %v348 = vunpack.c.l.b16 %v263
    %v349 = vunpack.c.h.b16 %v263
    %v350 = vunpack.c.l.b16 %v264
    %v351 = vunpack.c.h.b16 %v264
    %v352 = vunpack.c.l.b16 %v265
    %v353 = vunpack.c.h.b16 %v265
    %v354 = vunpack.c.l.b16 %v266
    %v355 = vunpack.c.h.b16 %v266
    %v356 = vunpack.c.l.b16 %v267
    %v357 = vunpack.c.h.b16 %v267
    %v358 = vunpack.c.l.b16 %v268
    %v359 = vunpack.c.h.b16 %v268
    %v360 = vunpack.c.l.b16 %v269
    %v361 = vunpack.c.h.b16 %v269
    %v362 = vunpack.c.l.b16 %v270
    %v363 = vunpack.c.h.b16 %v270
    %v364 = vunpack.c.l.b16 %v271
    %v365 = vunpack.c.h.b16 %v271
    %v366 = vunpack.c.l.b16 %v272
    %v367 = vunpack.c.h.b16 %v272
    %v368 = vunpack.c.l.b16 %v273
    %v369 = vunpack.c.h.b16 %v273
    %v370 = vunpack.c.l.b16 %v274
    %v371 = vunpack.c.h.b16 %v274
    %v372 = vunpack.c.l.b16 %v275
    %v373 = vunpack.c.h.b16 %v275
    %v374 = vunpack.c.l.b16 %v276
    %v375 = vunpack.c.h.b16 %v276
    %v376 = vunpack.c.l.b16 %v277
    %v377 = vunpack.c.h.b16 %v277
    %v378 = vunpack.c.l.b16 %v278
    %v379 = vunpack.c.h.b16 %v278
    %v380 = vunpack.c.l.b16 %v279
    %v381 = vunpack.c.h.b16 %v279
    %v382 = vunpack.c.l.b16 %v280
    %v383 = vunpack.c.h.b16 %v280
    %v384 = vunpack.c.l.b16 %v281
    %v385 = vunpack.c.h.b16 %v281
    %v386 = vunpack.c.l.b16 %v282
    %v387 = vunpack.c.h.b16 %v282
    %v388 = vunpack.c.l.b16 %v283
    %v389 = vunpack.c.h.b16 %v283
    %v390 = vunpack.c.l.b16 %v284
    %v391 = vunpack.c.h.b16 %v284
    %v392 = vunpack.c.l.b16 %v285
    %v393 = vunpack.c.h.b16 %v285
    %v394 = vpack.c.b16 %v332, %v330
    %v395 = vpack.c.b16 %v333, %v331
    %v396 = vpack.c.b16 %v336, %v334
    %v397 = vpack.c.b16 %v337, %v335
    %v398 = vpack.c.b16 %v340, %v338
    %v399 = vpack.c.b16 %v341, %v339
    %v400 = vpack.c.b16 %v344, %v342
    %v401 = vpack.c.b16 %v345, %v343
    %v402 = vpack.c.b16 %v348, %v346
    %v403 = vpack.c.b16 %v349, %v347
    %v404 = vpack.c.b16 %v352, %v350
    %v405 = vpack.c.b16 %v353, %v351
    %v406 = vpack.c.b16 %v356, %v354
    %v407 = vpack.c.b16 %v357, %v355
    %v408 = vpack.c.b16 %v360, %v358
    %v409 = vpack.c.b16 %v361, %v359
    %v410 = vpack.c.b16 %v364, %v362
    %v411 = vpack.c.b16 %v365, %v363
    %v412 = vpack.c.b16 %v368, %v366
    %v413 = vpack.c.b16 %v369, %v367
    %v414 = vpack.c.b16 %v372, %v370
    %v415 = vpack.c.b16 %v373, %v371
    %v416 = vpack.c.b16 %v376, %v374
    %v417 = vpack.c.b16 %v377, %v375
    %v418 = vpack.c.b16 %v380, %v378
    %v419 = vpack.c.b16 %v381, %v379
    %v420 = vpack.c.b16 %v384, %v382
    %v421 = vpack.c.b16 %v385, %v383
    %v422 = vpack.c.b16 %v388, %v386
    %v423 = vpack.c.b16 %v389, %v387
    %v424 = vpack.c.b16 %v392, %v390
    %v425 = vpack.c.b16 %v393, %v391
    %458 = vmatprep.subr.bf16.mxu0 %v395
    %459 = vmatpush1.bf16.msra.mxu0 %v394
    %460 = vmatprep.subr.bf16.mxu0 %v397
    %461 = vmatpush1.bf16.msra.mxu0 %v396
    %462 = vmatprep.subr.bf16.mxu0 %v399
    %463 = vmatpush1.bf16.msra.mxu0 %v398
    %464 = vmatprep.subr.bf16.mxu0 %v401
    %465 = vmatpush1.bf16.msra.mxu0 %v400
    %466 = vmatprep.subr.bf16.mxu0 %v403
    %467 = vmatpush1.bf16.msra.mxu0 %v402
    %468 = vmatprep.subr.bf16.mxu0 %v405
    %469 = vmatpush1.bf16.msra.mxu0 %v404
    %470 = vmatprep.subr.bf16.mxu0 %v407
    %471 = vmatpush1.bf16.msra.mxu0 %v406
    %472 = vmatprep.subr.bf16.mxu0 %v409
    %473 = vmatpush1.bf16.msra.mxu0 %v408
    %474 = vmatprep.subr.bf16.mxu0 %v411
    %475 = vmatpush1.bf16.msra.mxu0 %v410
    %476 = vmatprep.subr.bf16.mxu0 %v413
    %477 = vmatpush1.bf16.msra.mxu0 %v412
    %478 = vmatprep.subr.bf16.mxu0 %v415
    %479 = vmatpush1.bf16.msra.mxu0 %v414
    %480 = vmatprep.subr.bf16.mxu0 %v417
    %481 = vmatpush1.bf16.msra.mxu0 %v416
    %482 = vmatprep.subr.bf16.mxu0 %v419
    %483 = vmatpush1.bf16.msra.mxu0 %v418
    %484 = vmatprep.subr.bf16.mxu0 %v421
    %485 = vmatpush1.bf16.msra.mxu0 %v420
    %486 = vmatprep.subr.bf16.mxu0 %v423
    %487 = vmatpush1.bf16.msra.mxu0 %v422
    %488 = vmatprep.subr.bf16.mxu0 %v425
    %489 = vmatpush1.bf16.msra.mxu0 %v424
    %490 = vmatprep.mubr.bf16.mxu0 %v253
    %491 = vmatmul.mubr.bf16.gmra.mrb[0].mxu0 %v252
    %v492 = vpop.f32.mrb[0].mxu0
    %v493 = vadd.f32 %v291, %v492
    %v494 = vpop.f32.mrb[0].mxu0
    %v495 = vadd.f32 %v295, %v494
    %v496 = vpop.f32.mrb[0].mxu0
    %v497 = vpop.f32.mrb[0].mxu0
    %498 = vdwg.mxu0
    %vm499 = vcmp.gt.f32.partialorder %v493, 0.0
    %vm500 = vcmp.gt.f32.partialorder %v495, 0.0
    %v501 = vmul.f32 %v493, 0.2
    %v502 = vmul.f32 %v495, 0.2
    %v503 = vsel %vm499, %v493, %v501
    %v504 = vsel %vm500, %v495, %v502
    %v505 = vpack.c.bf16 %v503, %v503
    %v506 = vpack.c.bf16 %v504, %v504
    %v507 = vld [vmem:[#allocation4] sm:$0xff]
    %v508 = vld [vmem:[#allocation4 + $0x8] sm:$0xff]
    %v509 = vld [vmem:[#allocation4 + $0x10] sm:$0xff]
    %v510 = vld [vmem:[#allocation4 + $0x18] sm:$0xff]
    %v511 = vld [vmem:[#allocation4 + $0x20] sm:$0xff]
    %v512 = vld [vmem:[#allocation4 + $0x28] sm:$0xff]
    %v513 = vld [vmem:[#allocation4 + $0x30] sm:$0xff]
    %v514 = vld [vmem:[#allocation4 + $0x38] sm:$0xff]
    %v515 = vld [vmem:[#allocation4 + $0x40] sm:$0xff]
    %v516 = vld [vmem:[#allocation4 + $0x48] sm:$0xff]
    %v517 = vld [vmem:[#allocation4 + $0x50] sm:$0xff]
    %v518 = vld [vmem:[#allocation4 + $0x58] sm:$0xff]
    %v519 = vld [vmem:[#allocation4 + $0x60] sm:$0xff]
    %v520 = vld [vmem:[#allocation4 + $0x68] sm:$0xff]
    %v521 = vld [vmem:[#allocation4 + $0x70] sm:$0xff]
    %v522 = vld [vmem:[#allocation4 + $0x78] sm:$0xff]
    %v523 = vld [vmem:[#allocation4 + $0x80] sm:$0xff]
    %v524 = vld [vmem:[#allocation4 + $0x88] sm:$0xff]
    %v525 = vld [vmem:[#allocation4 + $0x90] sm:$0xff]
    %v526 = vld [vmem:[#allocation4 + $0x98] sm:$0xff]
    %v527 = vld [vmem:[#allocation4 + $0xa0] sm:$0xff]
    %v528 = vld [vmem:[#allocation4 + $0xa8] sm:$0xff]
    %v529 = vld [vmem:[#allocation4 + $0xb0] sm:$0xff]
    %v530 = vld [vmem:[#allocation4 + $0xb8] sm:$0xff]
    %v531 = vld [vmem:[#allocation4 + $0xc0] sm:$0xff]
    %v532 = vld [vmem:[#allocation4 + $0xc8] sm:$0xff]
    %v533 = vld [vmem:[#allocation4 + $0xd0] sm:$0xff]
    %v534 = vld [vmem:[#allocation4 + $0xd8] sm:$0xff]
    %v535 = vld [vmem:[#allocation4 + $0xe0] sm:$0xff]
    %v536 = vld [vmem:[#allocation4 + $0xe8] sm:$0xff]
    %v537 = vld [vmem:[#allocation4 + $0xf0] sm:$0xff]
    %v538 = vld [vmem:[#allocation4 + $0xf8] sm:$0xff]
    %v539 = vld [vmem:[%s8] sm:$0x3]
    %v541 = vlaneseq
    %v542 = vshrl.u32 %v541, 7
    %v543 = vsub.s32 0, %v542
    %v544 = vrot.slane %v539, %v543
    %v545 = vlaneseq
    %v546 = vshrl.u32 %v545, 7
    %v547 = vsub.s32 1, %v546
    %v548 = vrot.slane %v539, %v547
    %v583 = vunpack.c.l.b16 %v507
    %v584 = vunpack.c.h.b16 %v507
    %v585 = vunpack.c.l.b16 %v508
    %v586 = vunpack.c.h.b16 %v508
    %v587 = vunpack.c.l.b16 %v509
    %v588 = vunpack.c.h.b16 %v509
    %v589 = vunpack.c.l.b16 %v510
    %v590 = vunpack.c.h.b16 %v510
    %v591 = vunpack.c.l.b16 %v511
    %v592 = vunpack.c.h.b16 %v511
    %v593 = vunpack.c.l.b16 %v512
    %v594 = vunpack.c.h.b16 %v512
    %v595 = vunpack.c.l.b16 %v513
    %v596 = vunpack.c.h.b16 %v513
    %v597 = vunpack.c.l.b16 %v514
    %v598 = vunpack.c.h.b16 %v514
    %v599 = vunpack.c.l.b16 %v515
    %v600 = vunpack.c.h.b16 %v515
    %v601 = vunpack.c.l.b16 %v516
    %v602 = vunpack.c.h.b16 %v516
    %v603 = vunpack.c.l.b16 %v517
    %v604 = vunpack.c.h.b16 %v517
    %v605 = vunpack.c.l.b16 %v518
    %v606 = vunpack.c.h.b16 %v518
    %v607 = vunpack.c.l.b16 %v519
    %v608 = vunpack.c.h.b16 %v519
    %v609 = vunpack.c.l.b16 %v520
    %v610 = vunpack.c.h.b16 %v520
    %v611 = vunpack.c.l.b16 %v521
    %v612 = vunpack.c.h.b16 %v521
    %v613 = vunpack.c.l.b16 %v522
    %v614 = vunpack.c.h.b16 %v522
    %v615 = vunpack.c.l.b16 %v523
    %v616 = vunpack.c.h.b16 %v523
    %v617 = vunpack.c.l.b16 %v524
    %v618 = vunpack.c.h.b16 %v524
    %v619 = vunpack.c.l.b16 %v525
    %v620 = vunpack.c.h.b16 %v525
    %v621 = vunpack.c.l.b16 %v526
    %v622 = vunpack.c.h.b16 %v526
    %v623 = vunpack.c.l.b16 %v527
    %v624 = vunpack.c.h.b16 %v527
    %v625 = vunpack.c.l.b16 %v528
    %v626 = vunpack.c.h.b16 %v528
    %v627 = vunpack.c.l.b16 %v529
    %v628 = vunpack.c.h.b16 %v529
    %v629 = vunpack.c.l.b16 %v530
    %v630 = vunpack.c.h.b16 %v530
    %v631 = vunpack.c.l.b16 %v531
    %v632 = vunpack.c.h.b16 %v531
    %v633 = vunpack.c.l.b16 %v532
    %v634 = vunpack.c.h.b16 %v532
    %v635 = vunpack.c.l.b16 %v533
    %v636 = vunpack.c.h.b16 %v533
    %v637 = vunpack.c.l.b16 %v534
    %v638 = vunpack.c.h.b16 %v534
    %v639 = vunpack.c.l.b16 %v535
    %v640 = vunpack.c.h.b16 %v535
    %v641 = vunpack.c.l.b16 %v536
    %v642 = vunpack.c.h.b16 %v536
    %v643 = vunpack.c.l.b16 %v537
    %v644 = vunpack.c.h.b16 %v537
    %v645 = vunpack.c.l.b16 %v538
    %v646 = vunpack.c.h.b16 %v538
    %v647 = vpack.c.b16 %v585, %v583
    %v648 = vpack.c.b16 %v586, %v584
    %v649 = vpack.c.b16 %v589, %v587
    %v650 = vpack.c.b16 %v590, %v588
    %v651 = vpack.c.b16 %v593, %v591
    %v652 = vpack.c.b16 %v594, %v592
    %v653 = vpack.c.b16 %v597, %v595
    %v654 = vpack.c.b16 %v598, %v596
    %v655 = vpack.c.b16 %v601, %v599
    %v656 = vpack.c.b16 %v602, %v600
    %v657 = vpack.c.b16 %v605, %v603
    %v658 = vpack.c.b16 %v606, %v604
    %v659 = vpack.c.b16 %v609, %v607
    %v660 = vpack.c.b16 %v610, %v608
    %v661 = vpack.c.b16 %v613, %v611
    %v662 = vpack.c.b16 %v614, %v612
    %v663 = vpack.c.b16 %v617, %v615
    %v664 = vpack.c.b16 %v618, %v616
    %v665 = vpack.c.b16 %v621, %v619
    %v666 = vpack.c.b16 %v622, %v620
    %v667 = vpack.c.b16 %v625, %v623
    %v668 = vpack.c.b16 %v626, %v624
    %v669 = vpack.c.b16 %v629, %v627
    %v670 = vpack.c.b16 %v630, %v628
    %v671 = vpack.c.b16 %v633, %v631
    %v672 = vpack.c.b16 %v634, %v632
    %v673 = vpack.c.b16 %v637, %v635
    %v674 = vpack.c.b16 %v638, %v636
    %v675 = vpack.c.b16 %v641, %v639
    %v676 = vpack.c.b16 %v642, %v640
    %v677 = vpack.c.b16 %v645, %v643
    %v678 = vpack.c.b16 %v646, %v644
    %711 = vmatprep.subr.bf16.mxu0 %v648
    %712 = vmatpush1.bf16.msra.mxu0 %v647
    %713 = vmatprep.subr.bf16.mxu0 %v650
    %714 = vmatpush1.bf16.msra.mxu0 %v649
    %715 = vmatprep.subr.bf16.mxu0 %v652
    %716 = vmatpush1.bf16.msra.mxu0 %v651
    %717 = vmatprep.subr.bf16.mxu0 %v654
    %718 = vmatpush1.bf16.msra.mxu0 %v653
    %719 = vmatprep.subr.bf16.mxu0 %v656
    %720 = vmatpush1.bf16.msra.mxu0 %v655
    %721 = vmatprep.subr.bf16.mxu0 %v658
    %722 = vmatpush1.bf16.msra.mxu0 %v657
    %723 = vmatprep.subr.bf16.mxu0 %v660
    %724 = vmatpush1.bf16.msra.mxu0 %v659
    %725 = vmatprep.subr.bf16.mxu0 %v662
    %726 = vmatpush1.bf16.msra.mxu0 %v661
    %727 = vmatprep.subr.bf16.mxu0 %v664
    %728 = vmatpush1.bf16.msra.mxu0 %v663
    %729 = vmatprep.subr.bf16.mxu0 %v666
    %730 = vmatpush1.bf16.msra.mxu0 %v665
    %731 = vmatprep.subr.bf16.mxu0 %v668
    %732 = vmatpush1.bf16.msra.mxu0 %v667
    %733 = vmatprep.subr.bf16.mxu0 %v670
    %734 = vmatpush1.bf16.msra.mxu0 %v669
    %735 = vmatprep.subr.bf16.mxu0 %v672
    %736 = vmatpush1.bf16.msra.mxu0 %v671
    %737 = vmatprep.subr.bf16.mxu0 %v674
    %738 = vmatpush1.bf16.msra.mxu0 %v673
    %739 = vmatprep.subr.bf16.mxu0 %v676
    %740 = vmatpush1.bf16.msra.mxu0 %v675
    %741 = vmatprep.subr.bf16.mxu0 %v678
    %742 = vmatpush1.bf16.msra.mxu0 %v677
    %743 = vmatprep.mubr.bf16.mxu0 %v506
    %744 = vmatmul.mubr.bf16.gmra.mrb[0].mxu0 %v505
    %v745 = vpop.f32.mrb[0].mxu0
    %v746 = vadd.f32 %v544, %v745
    %v747 = vpop.f32.mrb[0].mxu0
    %v748 = vadd.f32 %v548, %v747
    %v749 = vpop.f32.mrb[0].mxu0
    %v750 = vpop.f32.mrb[0].mxu0
    %751 = vdwg.mxu0
    %vm752 = vcmp.gt.f32.partialorder %v746, 0.0
    %vm753 = vcmp.gt.f32.partialorder %v748, 0.0
    %v754 = vmul.f32 %v746, 0.2
    %v755 = vmul.f32 %v748, 0.2
    %v756 = vsel %vm752, %v746, %v754
    %v757 = vsel %vm753, %v748, %v755
    %v758 = vpack.c.bf16 %v756, %v756
    %v759 = vpack.c.bf16 %v757, %v757
    %v760 = vld [vmem:[#allocation6] sm:$0xf]
    %v761 = vld [vmem:[#allocation6 + $0x4] sm:$0xf]
    %v762 = vld [vmem:[#allocation6 + $0x8] sm:$0xf]
    %v763 = vld [vmem:[#allocation6 + $0xc] sm:$0xf]
    %v764 = vld [vmem:[#allocation6 + $0x10] sm:$0xf]
    %v765 = vld [vmem:[#allocation6 + $0x14] sm:$0xf]
    %v766 = vld [vmem:[#allocation6 + $0x18] sm:$0xf]
    %v767 = vld [vmem:[#allocation6 + $0x1c] sm:$0xf]
    %v768 = vld [vmem:[#allocation6 + $0x20] sm:$0xf]
    %v769 = vld [vmem:[#allocation6 + $0x24] sm:$0xf]
    %v770 = vld [vmem:[#allocation6 + $0x28] sm:$0xf]
    %v771 = vld [vmem:[#allocation6 + $0x2c] sm:$0xf]
    %v772 = vld [vmem:[#allocation6 + $0x30] sm:$0xf]
    %v773 = vld [vmem:[#allocation6 + $0x34] sm:$0xf]
    %v774 = vld [vmem:[#allocation6 + $0x38] sm:$0xf]
    %v775 = vld [vmem:[#allocation6 + $0x3c] sm:$0xf]
    %v776 = vld [vmem:[#allocation6 + $0x40] sm:$0xf]
    %v777 = vld [vmem:[#allocation6 + $0x44] sm:$0xf]
    %v778 = vld [vmem:[#allocation6 + $0x48] sm:$0xf]
    %v779 = vld [vmem:[#allocation6 + $0x4c] sm:$0xf]
    %v780 = vld [vmem:[#allocation6 + $0x50] sm:$0xf]
    %v781 = vld [vmem:[#allocation6 + $0x54] sm:$0xf]
    %v782 = vld [vmem:[#allocation6 + $0x58] sm:$0xf]
    %v783 = vld [vmem:[#allocation6 + $0x5c] sm:$0xf]
    %v784 = vld [vmem:[#allocation6 + $0x60] sm:$0xf]
    %v785 = vld [vmem:[#allocation6 + $0x64] sm:$0xf]
    %v786 = vld [vmem:[#allocation6 + $0x68] sm:$0xf]
    %v787 = vld [vmem:[#allocation6 + $0x6c] sm:$0xf]
    %v788 = vld [vmem:[#allocation6 + $0x70] sm:$0xf]
    %v789 = vld [vmem:[#allocation6 + $0x74] sm:$0xf]
    %v790 = vld [vmem:[#allocation6 + $0x78] sm:$0xf]
    %v791 = vld [vmem:[#allocation6 + $0x7c] sm:$0xf]
    %v792 = vld [vmem:[%s10] sm:$0x1]
    %v794 = vlaneseq
    %v795 = vshrl.u32 %v794, 7
    %v796 = vsub.s32 0, %v795
    %v797 = vrot.slane %v792, %v796
    %v831 = vunpack.c.l.b16 %v760
    %v832 = vunpack.c.l.b16 %v761
    %v833 = vunpack.c.l.b16 %v762
    %v834 = vunpack.c.l.b16 %v763
    %v835 = vunpack.c.l.b16 %v764
    %v836 = vunpack.c.l.b16 %v765
    %v837 = vunpack.c.l.b16 %v766
    %v838 = vunpack.c.l.b16 %v767
    %v839 = vunpack.c.l.b16 %v768
    %v840 = vunpack.c.l.b16 %v769
    %v841 = vunpack.c.l.b16 %v770
    %v842 = vunpack.c.l.b16 %v771
    %v843 = vunpack.c.l.b16 %v772
    %v844 = vunpack.c.l.b16 %v773
    %v845 = vunpack.c.l.b16 %v774
    %v846 = vunpack.c.l.b16 %v775
    %v847 = vunpack.c.l.b16 %v776
    %v848 = vunpack.c.l.b16 %v777
    %v849 = vunpack.c.l.b16 %v778
    %v850 = vunpack.c.l.b16 %v779
    %v851 = vunpack.c.l.b16 %v780
    %v852 = vunpack.c.l.b16 %v781
    %v853 = vunpack.c.l.b16 %v782
    %v854 = vunpack.c.l.b16 %v783
    %v855 = vunpack.c.l.b16 %v784
    %v856 = vunpack.c.l.b16 %v785
    %v857 = vunpack.c.l.b16 %v786
    %v858 = vunpack.c.l.b16 %v787
    %v859 = vunpack.c.l.b16 %v788
    %v860 = vunpack.c.l.b16 %v789
    %v861 = vunpack.c.l.b16 %v790
    %v862 = vunpack.c.l.b16 %v791
    %v863 = vpack.c.b16 %v832, %v831
    %v864 = vpack.c.b16 %v834, %v833
    %v865 = vpack.c.b16 %v836, %v835
    %v866 = vpack.c.b16 %v838, %v837
    %v867 = vpack.c.b16 %v840, %v839
    %v868 = vpack.c.b16 %v842, %v841
    %v869 = vpack.c.b16 %v844, %v843
    %v870 = vpack.c.b16 %v846, %v845
    %v871 = vpack.c.b16 %v848, %v847
    %v872 = vpack.c.b16 %v850, %v849
    %v873 = vpack.c.b16 %v852, %v851
    %v874 = vpack.c.b16 %v854, %v853
    %v875 = vpack.c.b16 %v856, %v855
    %v876 = vpack.c.b16 %v858, %v857
    %v877 = vpack.c.b16 %v860, %v859
    %v878 = vpack.c.b16 %v862, %v861
    %895 = vmatprep.subr.bf16.mxu0 0
    %896 = vmatpush1.bf16.msra.mxu0 %v863
    %897 = vmatprep.subr.bf16.mxu0 0
    %898 = vmatpush1.bf16.msra.mxu0 %v864
    %899 = vmatprep.subr.bf16.mxu0 0
    %900 = vmatpush1.bf16.msra.mxu0 %v865
    %901 = vmatprep.subr.bf16.mxu0 0
    %902 = vmatpush1.bf16.msra.mxu0 %v866
    %903 = vmatprep.subr.bf16.mxu0 0
    %904 = vmatpush1.bf16.msra.mxu0 %v867
    %905 = vmatprep.subr.bf16.mxu0 0
    %906 = vmatpush1.bf16.msra.mxu0 %v868
    %907 = vmatprep.subr.bf16.mxu0 0
    %908 = vmatpush1.bf16.msra.mxu0 %v869
    %909 = vmatprep.subr.bf16.mxu0 0
    %910 = vmatpush1.bf16.msra.mxu0 %v870
    %911 = vmatprep.subr.bf16.mxu0 0
    %912 = vmatpush1.bf16.msra.mxu0 %v871
    %913 = vmatprep.subr.bf16.mxu0 0
    %914 = vmatpush1.bf16.msra.mxu0 %v872
    %915 = vmatprep.subr.bf16.mxu0 0
    %916 = vmatpush1.bf16.msra.mxu0 %v873
    %917 = vmatprep.subr.bf16.mxu0 0
    %918 = vmatpush1.bf16.msra.mxu0 %v874
    %919 = vmatprep.subr.bf16.mxu0 0
    %920 = vmatpush1.bf16.msra.mxu0 %v875
    %921 = vmatprep.subr.bf16.mxu0 0
    %922 = vmatpush1.bf16.msra.mxu0 %v876
    %923 = vmatprep.subr.bf16.mxu0 0
    %924 = vmatpush1.bf16.msra.mxu0 %v877
    %925 = vmatprep.subr.bf16.mxu0 0
    %926 = vmatpush1.bf16.msra.mxu0 %v878
    %927 = vmatprep.mubr.bf16.mxu0 %v759
    %928 = vmatmul.mubr.bf16.gmra.mrb[0].mxu0 %v758
    %v929 = vpop.f32.mrb[0].mxu0
    %v930 = vadd.f32 %v797, %v929
    %v931 = vpop.f32.mrb[0].mxu0
    %v932 = vpop.f32.mrb[0].mxu0
    %v933 = vpop.f32.mrb[0].mxu0
    %934 = vdwg.mxu0
    %v935 = vxor.u32 %v930, 2147483648
    %v936 = vmul.f32 %v935, 1.442695
    %v937 = vpow.pop %v936
    %v938 = vadd.f32 %v937, 1.0
    %v939 = vrcp.pop %v938
    %v940 = vmul.f32 1.0, %v939
    %941 = vst [vmem:[%s11] sm:$0xff] %v940
    // Predicated region
    $region58: #{discriminator1_forward.1} parent=1 // pred_check
      _
    $region59: #{discriminator1_forward.1} parent=1 // pred_check_branch
      %943 = sbr.rel (0) target = $region61
    $region60: #{discriminator1_forward.1} parent=1 // pred_region
      _
    $region61: #{discriminator1_forward.1} parent=1 // pred_fallthru
      _
    // Predicated region
    $region62: #{discriminator1_forward.1} parent=1 // pred_check
      _
    $region63: #{discriminator1_forward.1} parent=1 // pred_check_branch
      %945 = sbr.rel (0) target = $region65
    $region64: #{discriminator1_forward.1} parent=1 // pred_region
      _
    $region65: #{discriminator1_forward.1} parent=1 // pred_fallthru
      _
    %946 = vsyncpa [#allocation3], 1
    %947 = vsyncpa [#allocation5], 1

</llo_original>
